<compile_context>
chip_gen: v6e
topology: v6e:2x2x1
jax: 0.10.0
libtpu: 0.0.40
codegen_flags: <defaults>
</compile_context>

<pallas_src>
import functools
import math

import jax
import jax.numpy as jnp
from jax.experimental import pallas as pl
from jax.experimental.pallas import tpu as pltpu


# --------------------------------------------------------------------------- #
# Parameter preparation (one-time, outside the forward pass)
# --------------------------------------------------------------------------- #
def _fold_factor(hid_dim, out_dim, max_fold=16):
    """How many consecutive rows to pack side-by-side so that both the kernel's
    input slab (fold*hid_dim) and output slab (fold*out_dim) are multiples of
    128 lanes. Returns 1 (no folding) when not applicable."""
    if hid_dim % 128 == 0 and out_dim % 128 == 0:
        return 1
    if 128 % hid_dim != 0 or 128 % out_dim != 0:
        return 1
    f = math.lcm(128 // hid_dim, 128 // out_dim)
    return f if 1 < f <= max_fold else 1


def _block_diag(w, f):
    """(din, dout) -> (f*din, f*dout) with f copies of w on the block diagonal."""
    din, dout = w.shape
    eye = jnp.eye(f, dtype=w.dtype)
    return jnp.einsum("ij,ab->iajb", eye, w).reshape(f * din, f * dout)


def make_pos_prepare(w1, b1, w2, b2):
    """One-time parameter prep:
      * fold the module's trailing `* 4` into fc_2 (exact for power-of-two scale),
      * build block-diagonal row-folded weights so the kernel only ever touches
        lane-dense (multiple-of-128) operands.
    Weights are stored (in, out) so the kernel computes x @ w.
    Returns (w1, b1, w2, b2, fold, out_dim) for make_pos_forward."""
    out_dim = w2.shape[1]
    hid_dim = w1.shape[0]
    w2 = w2 * 4.0
    b2 = b2 * 4.0
    f = _fold_factor(hid_dim, out_dim)
    if f > 1:
        w1 = _block_diag(w1, f)
        b1 = jnp.tile(b1, f)
        w2 = _block_diag(w2, f)
        b2 = jnp.tile(b2, f)
    return w1, b1.reshape(1, -1), w2, b2.reshape(1, -1), f, out_dim


# --------------------------------------------------------------------------- #
# Kernel
# --------------------------------------------------------------------------- #
def _make_pos_kernel(x_ref, w1_ref, b1_ref, w2_ref, b2_ref, o_ref):
    """fc_1 -> ReLU -> (dropout = identity, eval mode) -> fc_2.
    The `* 4` is already folded into w2/b2. Operands are fed to the MXU in their
    native dtype (no f32 upcast); accumulation is f32."""
    h = jnp.dot(x_ref[...], w1_ref[...], preferred_element_type=jnp.float32)
    h = jnp.maximum(h + b1_ref[...].astype(jnp.float32), 0.0)      # bias + relu in f32
    y = jnp.dot(h.astype(w2_ref.dtype), w2_ref[...],
                preferred_element_type=jnp.float32)
    o_ref[...] = (y + b2_ref[...].astype(jnp.float32)).astype(o_ref.dtype)


# --------------------------------------------------------------------------- #
# Wrapper
# --------------------------------------------------------------------------- #
def _round_up(n, m):
    return (n + m - 1) // m * m


@functools.partial(jax.jit, static_argnames=("fold", "out_dim", "tile_m"))
def make_pos_forward(x, w1, b1, w2, b2, *, fold, out_dim, tile_m=1024):
    """x: (B, S, H) -> (B, S, out_dim). w1/b1/w2/b2 come from make_pos_prepare.
    tile_m ~ number of original rows processed per grid step."""
    B, S, H = x.shape
    f = fold
    Hf, Pf = w1.shape                     # folded feature dims (f*H, f*P)
    Of = w2.shape[1]                      # == f * out_dim
    M = B * S

    # ---- choose the M tile (in folded rows), cdiv grid + zero padding -------
    rows = pl.cdiv(M, f)                               # folded rows carrying data
    tm = _round_up(max(tile_m // f, 8), 8)             # target tile (folded rows)
    tm = min(tm, _round_up(rows, 8))                   # don't exceed the problem
    rows_pad = _round_up(rows, tm)
    grid = (rows_pad // tm,)

    # ---- lane-dense input slab (pure row-major view in HBM) -----------------
    x2d = x.reshape(M, H)
    M_pad = rows_pad * f
    if M_pad != M:
        x2d = jnp.pad(x2d, ((0, M_pad - M), (0, 0)))
    x_in = x2d.reshape(rows_pad, Hf)

    out = pl.pallas_call(
        _make_pos_kernel,
        out_shape=jax.ShapeDtypeStruct((rows_pad, Of), x.dtype),
        grid_spec=pltpu.PrefetchScalarGridSpec(
            num_scalar_prefetch=0,
            grid=grid,
            in_specs=[
                pl.BlockSpec((tm, Hf), lambda i: (i, 0)),   # x tile (streamed, lane-dense)
                pl.BlockSpec((Hf, Pf), lambda i: (0, 0)),   # w1 (resident)
                pl.BlockSpec((1, Pf), lambda i: (0, 0)),    # b1
                pl.BlockSpec((Pf, Of), lambda i: (0, 0)),   # w2 (resident)
                pl.BlockSpec((1, Of), lambda i: (0, 0)),    # b2
            ],
            out_specs=pl.BlockSpec((tm, Of), lambda i: (i, 0)),   # lane-dense output
        ),
        compiler_params=pltpu.CompilerParams(
            dimension_semantics=("parallel",),           # M axis shards across TCs (v7x)
            vmem_limit_bytes=64 * 1024 * 1024,           # headroom for large M tiles
        ),
    )(x_in, w1, b1, w2, b2)

    # Unfold (rows_pad, f*out_dim) -> (M_pad, out_dim), drop padding, restore (B, S, O).
    return out.reshape(M_pad, Of // f)[:M].reshape(B, S, out_dim)


# --------------------------------------------------------------------------- #
# Reference (matches the PyTorch module in eval mode)
# --------------------------------------------------------------------------- #
def reference_forward(x, w1, b1, w2, b2):
    h = jnp.maximum(jnp.einsum("bsh,hp->bsp", x, w1) + b1, 0.0)
    return (jnp.einsum("bsp,po->bso", h, w2) + b2) * 4.0


if __name__ == "__main__":
    # Small shapes consistent with the module: hid_dim=32, pf_dim=64, output_dim=32
    B, S, HID, PF, OUT = 2, 8, 32, 64, 32

    key = jax.random.PRNGKey(0)
    kx, k1, k2, k3, k4 = jax.random.split(key, 5)

    x = jax.random.normal(kx, (B, S, HID), dtype=jnp.float32)
    # nn.Linear(hid, pf) / nn.Linear(pf, out) parameters, stored as (in, out).
    w1 = jax.random.normal(k1, (HID, PF), dtype=jnp.float32) * (1.0 / jnp.sqrt(HID))
    b1 = jax.random.normal(k2, (PF,), dtype=jnp.float32) * 0.01
    w2 = jax.random.normal(k3, (PF, OUT), dtype=jnp.float32) * (1.0 / jnp.sqrt(PF))
    b2 = jax.random.normal(k4, (OUT,), dtype=jnp.float32) * 0.01

    # One-time parameter preparation (folds *4, builds lane-dense block-diag weights).
    w1p, b1p, w2p, b2p, fold, out_dim = make_pos_prepare(w1, b1, w2, b2)

    out = make_pos_forward(x, w1p, b1p, w2p, b2p, fold=fold, out_dim=out_dim)
    jax.block_until_ready(out)

    ref = reference_forward(x, w1, b1, w2, b2)
    assert out.shape == (B, S, OUT)
    assert jnp.allclose(out, ref, atol=1e-4, rtol=1e-4), "mismatch vs reference"

    print("KERNEL_OK")
</pallas_src>

<mosaic_0001>
module attributes {stable_mosaic.version = 11 : i64} {
  func.func @_make_pos_kernel(%arg0: i32, %arg1: memref<8x128xf32, #tpu.memory_space<vmem>>, %arg2: memref<128x256xf32, #tpu.memory_space<vmem>>, %arg3: memref<1x256xf32, #tpu.memory_space<vmem>>, %arg4: memref<256x128xf32, #tpu.memory_space<vmem>>, %arg5: memref<1x128xf32, #tpu.memory_space<vmem>>, %arg6: memref<8x128xf32, #tpu.memory_space<vmem>>) attributes {dimension_semantics = [#tpu.dimension_semantics<parallel>], iteration_bounds = array<i64: 1>, scalar_prefetch = 0 : i64, scratch_operands = 0 : i64, tpu.core_type = #tpu.core_type<tc>, window_params = [{transform_indices = @transform_0, window_bounds = array<i64: 8, 128>}, {pipeline_mode = #tpu.pipeline_mode<synchronous>, transform_indices = @transform_1, window_bounds = array<i64: 128, 256>}, {pipeline_mode = #tpu.pipeline_mode<synchronous>, transform_indices = @transform_2, window_bounds = array<i64: 1, 256>}, {pipeline_mode = #tpu.pipeline_mode<synchronous>, transform_indices = @transform_3, window_bounds = array<i64: 256, 128>}, {pipeline_mode = #tpu.pipeline_mode<synchronous>, transform_indices = @transform_4, window_bounds = array<i64: 1, 128>}, {transform_indices = @transform_5, window_bounds = array<i64: 8, 128>}]} {
    %c0 = arith.constant 0 : index
    %c0_0 = arith.constant 0 : index
    %0 = vector.load %arg1[%c0, %c0_0] : memref<8x128xf32, #tpu.memory_space<vmem>>, vector<8x128xf32>
    %c0_1 = arith.constant 0 : index
    %c0_2 = arith.constant 0 : index
    %1 = vector.load %arg2[%c0_1, %c0_2] : memref<128x256xf32, #tpu.memory_space<vmem>>, vector<128x256xf32>
    %cst = arith.constant dense<0.000000e+00> : vector<8x256xf32>
    %2 = tpu.matmul %0, %1, %cst {dimension_numbers = #tpu.dot_dimension_numbers<[1], [0], [0], [1], [0, 0, 1, 1], [], []>} : vector<8x128xf32>, vector<128x256xf32>, vector<8x256xf32> -> vector<8x256xf32>
    %c0_3 = arith.constant 0 : index
    %c0_4 = arith.constant 0 : index
    %3 = vector.load %arg3[%c0_3, %c0_4] : memref<1x256xf32, #tpu.memory_space<vmem>>, vector<1x256xf32>
    %4 = vector.broadcast %3 : vector<1x256xf32> to vector<8x256xf32>
    %5 = arith.addf %2, %4 : vector<8x256xf32>
    %cst_5 = arith.constant 0.000000e+00 : f32
    %6 = vector.broadcast %cst_5 : f32 to vector<8x256xf32>
    %7 = arith.maximumf %5, %6 : vector<8x256xf32>
    %c0_6 = arith.constant 0 : index
    %c0_7 = arith.constant 0 : index
    %8 = vector.load %arg4[%c0_6, %c0_7] : memref<256x128xf32, #tpu.memory_space<vmem>>, vector<256x128xf32>
    %cst_8 = arith.constant dense<0.000000e+00> : vector<8x128xf32>
    %9 = tpu.matmul %7, %8, %cst_8 {dimension_numbers = #tpu.dot_dimension_numbers<[1], [0], [0], [1], [0, 0, 1, 1], [], []>} : vector<8x256xf32>, vector<256x128xf32>, vector<8x128xf32> -> vector<8x128xf32>
    %c0_9 = arith.constant 0 : index
    %c0_10 = arith.constant 0 : index
    %10 = vector.load %arg5[%c0_9, %c0_10] : memref<1x128xf32, #tpu.memory_space<vmem>>, vector<1x128xf32>
    %11 = vector.broadcast %10 : vector<1x128xf32> to vector<8x128xf32>
    %12 = arith.addf %9, %11 : vector<8x128xf32>
    %c0_11 = arith.constant 0 : index
    %c0_12 = arith.constant 0 : index
    %13 = vector.load %arg6[%c0_11, %c0_12] : memref<8x128xf32, #tpu.memory_space<vmem>>, vector<8x128xf32>
    tpu.vector_store %arg6[%c0_11, %c0_12], %12 {strides = array<i32>} : memref<8x128xf32, #tpu.memory_space<vmem>>, vector<8x128xf32>,
    return
  }
  func.func @transform_0(%arg0: i32) -> (i32, i32) {
    %c0_i32 = arith.constant 0 : i32
    %c0_i32_0 = arith.constant 0 : i32
    return %arg0, %c0_i32 : i32, i32
  }
  func.func @transform_1(%arg0: i32) -> (i32, i32) {
    %c0_i32 = arith.constant 0 : i32
    %c0_i32_0 = arith.constant 0 : i32
    %c0_i32_1 = arith.constant 0 : i32
    return %c0_i32, %c0_i32_0 : i32, i32
  }
  func.func @transform_2(%arg0: i32) -> (i32, i32) {
    %c0_i32 = arith.constant 0 : i32
    %c0_i32_0 = arith.constant 0 : i32
    %c0_i32_1 = arith.constant 0 : i32
    return %c0_i32, %c0_i32_0 : i32, i32
  }
  func.func @transform_3(%arg0: i32) -> (i32, i32) {
    %c0_i32 = arith.constant 0 : i32
    %c0_i32_0 = arith.constant 0 : i32
    %c0_i32_1 = arith.constant 0 : i32
    return %c0_i32, %c0_i32_0 : i32, i32
  }
  func.func @transform_4(%arg0: i32) -> (i32, i32) {
    %c0_i32 = arith.constant 0 : i32
    %c0_i32_0 = arith.constant 0 : i32
    %c0_i32_1 = arith.constant 0 : i32
    return %c0_i32, %c0_i32_0 : i32, i32
  }
  func.func @transform_5(%arg0: i32) -> (i32, i32) {
    %c0_i32 = arith.constant 0 : i32
    %c0_i32_0 = arith.constant 0 : i32
    return %arg0, %c0_i32 : i32, i32
  }
}

</mosaic_0001>

<llo_original>
// kernel: make_pos_forward.1
$region0: #{make_pos_forward.1}
  #allocation0 [shape = 'u32[]', space=smem, size = 0x4, offset = 0x4, fixed_abs, tag = 'smem constant byte address 0x4 - core index']
  #allocation1 [shape = 'u32[144,128]{1,0:T(1,128)}', space=vmem, size = 0x12000, scoped, tag = 'internal scratch']
  %s0 = inlined_call_operand.vmem [shape: f32[8,128], index: 0, kind: input, shape index: {}]
  %s1 = inlined_call_operand.hbm [shape: f32[128,256], index: 1, kind: input, shape index: {}]
  %s2 = inlined_call_operand.vmem [shape: f32[1,256], index: 2, kind: input, shape index: {}]
  %s3 = inlined_call_operand.hbm [shape: f32[256,128], index: 3, kind: input, shape index: {}]
  %s4 = inlined_call_operand.vmem [shape: f32[1,128], index: 4, kind: input, shape index: {}]
  %s5 = inlined_call_operand.vmem [shape: f32[8,128], index: 5, kind: output, shape index: {}]
  %s6 = sld [smem:[#allocation0]]
  $region38: #{make_pos_forward.1} parent=0
    _
  %s8 = ssub.s32 1, %s6
  %s9 = scalar_select 0, %s8, %s6
  $region1: #{make_pos_forward.1} parent=0
    #allocation2 [shape = 'u8[131072]{0}', space=vmem, size = 0x20000, scoped, tag = 'input window, operand 1, single buffered']
    #allocation3 [shape = 's32[1]{0}', space=sflag, size = 0x4, scoped, tag = 'scoped memory for make_pos_forward.1']
    #allocation4 [shape = 'u8[131072]{0}', space=vmem, size = 0x20000, scoped, tag = 'input window, operand 3, single buffered']
    #allocation5 [shape = 's32[1]{0}', space=sflag, size = 0x4, scoped, tag = 'scoped memory for make_pos_forward.1']
    %10 = vsyncpa [#allocation3], 0
    %11 = vsyncpa [#allocation5], 0
    // Predicated region
    $region2: #{make_pos_forward.1} parent=1 // pred_check
      _
    $region3: #{make_pos_forward.1} parent=1 // pred_check_branch
      %13 = sbr.rel (0) target = $region5
    $region4: #{make_pos_forward.1} parent=1 // pred_region
      _
    $region5: #{make_pos_forward.1} parent=1 // pred_fallthru
      _
    // Predicated region
    $region6: #{make_pos_forward.1} parent=1 // pred_check
      _
    $region7: #{make_pos_forward.1} parent=1 // pred_check_branch
      %15 = sbr.rel (0) target = $region9
    $region8: #{make_pos_forward.1} parent=1 // pred_region
      %s17 = ssub.s32 4096, 4096
      %18 = vsyncadd [#allocation3], %s17
      %s19 = sshll.u32 [#allocation2], 4
      %s20 = int_to_ptr.vmem [resolvable:$true] %s19
      %25 = dma.hbm_to_vmem [thread:$0]  %s1, 4096, %s20, [#allocation3], 256, 256, 16
    $region9: #{make_pos_forward.1} parent=1 // pred_fallthru
      _
    // Predicated region
    $region10: #{make_pos_forward.1} parent=1 // pred_check
      _
    $region11: #{make_pos_forward.1} parent=1 // pred_check_branch
      %27 = sbr.rel (0) target = $region13
    $region12: #{make_pos_forward.1} parent=1 // pred_region
      _
    $region13: #{make_pos_forward.1} parent=1 // pred_fallthru
      _
    // Predicated region
    $region14: #{make_pos_forward.1} parent=1 // pred_check
      _
    $region15: #{make_pos_forward.1} parent=1 // pred_check_branch
      %29 = sbr.rel (0) target = $region17
    $region16: #{make_pos_forward.1} parent=1 // pred_region
      %s31 = ssub.s32 4096, 4096
      %32 = vsyncadd [#allocation5], %s31
      %s33 = sshll.u32 [#allocation4], 4
      %s34 = int_to_ptr.vmem [resolvable:$true] %s33
      %39 = dma.hbm_to_vmem [thread:$0]  %s3, 4096, %s34, [#allocation5], 128, 128, 8
    $region17: #{make_pos_forward.1} parent=1 // pred_fallthru
      _
    // Predicated region
    $region18: #{make_pos_forward.1} parent=1 // pred_check
      _
    $region19: #{make_pos_forward.1} parent=1 // pred_check_branch
      %41 = sbr.rel (0) target = $region21
    $region20: #{make_pos_forward.1} parent=1 // pred_region
      _
    $region21: #{make_pos_forward.1} parent=1 // pred_fallthru
      _
    // Predicated region
    $region22: #{make_pos_forward.1} parent=1 // pred_check
      _
    $region23: #{make_pos_forward.1} parent=1 // pred_check_branch
      %43 = sbr.rel (0) target = $region25
    $region24: #{make_pos_forward.1} parent=1 // pred_region
      %44 = dma.done [#allocation3], 4096
    $region25: #{make_pos_forward.1} parent=1 // pred_fallthru
      _
    // Predicated region
    $region26: #{make_pos_forward.1} parent=1 // pred_check
      _
    $region27: #{make_pos_forward.1} parent=1 // pred_check_branch
      %46 = sbr.rel (0) target = $region29
    $region28: #{make_pos_forward.1} parent=1 // pred_region
      %47 = dma.done [#allocation5], 4096
    $region29: #{make_pos_forward.1} parent=1 // pred_fallthru
      _
    %v48 = vld [vmem:[%s0] sm:$0xff]
    %v49 = vld [vmem:[#allocation2] sm:$0xff]
    %v50 = vld [vmem:[#allocation2 + $0x8] sm:$0xff]
    %v51 = vld [vmem:[#allocation2 + $0x10] sm:$0xff]
    %v52 = vld [vmem:[#allocation2 + $0x18] sm:$0xff]
    %v53 = vld [vmem:[#allocation2 + $0x20] sm:$0xff]
    %v54 = vld [vmem:[#allocation2 + $0x28] sm:$0xff]
    %v55 = vld [vmem:[#allocation2 + $0x30] sm:$0xff]
    %v56 = vld [vmem:[#allocation2 + $0x38] sm:$0xff]
    %v57 = vld [vmem:[#allocation2 + $0x40] sm:$0xff]
    %v58 = vld [vmem:[#allocation2 + $0x48] sm:$0xff]
    %v59 = vld [vmem:[#allocation2 + $0x50] sm:$0xff]
    %v60 = vld [vmem:[#allocation2 + $0x58] sm:$0xff]
    %v61 = vld [vmem:[#allocation2 + $0x60] sm:$0xff]
    %v62 = vld [vmem:[#allocation2 + $0x68] sm:$0xff]
    %v63 = vld [vmem:[#allocation2 + $0x70] sm:$0xff]
    %v64 = vld [vmem:[#allocation2 + $0x78] sm:$0xff]
    %v65 = vld [vmem:[#allocation2 + $0x80] sm:$0xff]
    %v66 = vld [vmem:[#allocation2 + $0x88] sm:$0xff]
    %v67 = vld [vmem:[#allocation2 + $0x90] sm:$0xff]
    %v68 = vld [vmem:[#allocation2 + $0x98] sm:$0xff]
    %v69 = vld [vmem:[#allocation2 + $0xa0] sm:$0xff]
    %v70 = vld [vmem:[#allocation2 + $0xa8] sm:$0xff]
    %v71 = vld [vmem:[#allocation2 + $0xb0] sm:$0xff]
    %v72 = vld [vmem:[#allocation2 + $0xb8] sm:$0xff]
    %v73 = vld [vmem:[#allocation2 + $0xc0] sm:$0xff]
    %v74 = vld [vmem:[#allocation2 + $0xc8] sm:$0xff]
    %v75 = vld [vmem:[#allocation2 + $0xd0] sm:$0xff]
    %v76 = vld [vmem:[#allocation2 + $0xd8] sm:$0xff]
    %v77 = vld [vmem:[#allocation2 + $0xe0] sm:$0xff]
    %v78 = vld [vmem:[#allocation2 + $0xe8] sm:$0xff]
    %v79 = vld [vmem:[#allocation2 + $0xf0] sm:$0xff]
    %v80 = vld [vmem:[#allocation2 + $0xf8] sm:$0xff]
    %v81 = vld [vmem:[%s2] sm:$0x3]
    %v83 = vlaneseq
    %v84 = vshrl.u32 %v83, 7
    %v85 = vsub.s32 0, %v84
    %v86 = vrot.slane %v81, %v85
    %v87 = vlaneseq
    %v88 = vshrl.u32 %v87, 7
    %v89 = vsub.s32 1, %v88
    %v90 = vrot.slane %v81, %v89
    %93 = vmatprep.subr.mxu0 %v80
    %94 = vmatpush1.msra.mxu0 %v79
    %95 = vmatprep.subr.mxu0 %v78
    %96 = vmatpush1.msra.mxu0 %v77
    %97 = vmatprep.subr.mxu0 %v76
    %98 = vmatpush1.msra.mxu0 %v75
    %99 = vmatprep.subr.mxu0 %v74
    %100 = vmatpush1.msra.mxu0 %v73
    %101 = vmatprep.subr.mxu0 %v72
    %102 = vmatpush1.msra.mxu0 %v71
    %103 = vmatprep.subr.mxu0 %v70
    %104 = vmatpush1.msra.mxu0 %v69
    %105 = vmatprep.subr.mxu0 %v68
    %106 = vmatpush1.msra.mxu0 %v67
    %107 = vmatprep.subr.mxu0 %v66
    %108 = vmatpush1.msra.mxu0 %v65
    %109 = vmatprep.subr.mxu0 %v64
    %110 = vmatpush1.msra.mxu0 %v63
    %111 = vmatprep.subr.mxu0 %v62
    %112 = vmatpush1.msra.mxu0 %v61
    %113 = vmatprep.subr.mxu0 %v60
    %114 = vmatpush1.msra.mxu0 %v59
    %115 = vmatprep.subr.mxu0 %v58
    %116 = vmatpush1.msra.mxu0 %v57
    %117 = vmatprep.subr.mxu0 %v56
    %118 = vmatpush1.msra.mxu0 %v55
    %119 = vmatprep.subr.mxu0 %v54
    %120 = vmatpush1.msra.mxu0 %v53
    %121 = vmatprep.subr.mxu0 %v52
    %122 = vmatpush1.msra.mxu0 %v51
    %123 = vmatprep.subr.mxu0 %v50
    %124 = vmatpush1.msra.mxu0 %v49
    %125 = vmatprep.subr.mxu0 0.0
    %126 = vmatpush2.msra.mxu0 0.0
    %127 = vmatprep.subr.mxu0 0.0
    %128 = vmatpush2.msra.mxu0 0.0
    %129 = vmatprep.subr.mxu0 0.0
    %130 = vmatpush2.msra.mxu0 0.0
    %131 = vmatprep.subr.mxu0 0.0
    %132 = vmatpush2.msra.mxu0 0.0
    %133 = vmatprep.subr.mxu0 0.0
    %134 = vmatpush2.msra.mxu0 0.0
    %135 = vmatprep.subr.mxu0 0.0
    %136 = vmatpush2.msra.mxu0 0.0
    %137 = vmatprep.subr.mxu0 0.0
    %138 = vmatpush2.msra.mxu0 0.0
    %139 = vmatprep.subr.mxu0 0.0
    %140 = vmatpush2.msra.mxu0 0.0
    %141 = vmatprep.subr.mxu0 0.0
    %142 = vmatpush2.msra.mxu0 0.0
    %143 = vmatprep.subr.mxu0 0.0
    %144 = vmatpush2.msra.mxu0 0.0
    %145 = vmatprep.subr.mxu0 0.0
    %146 = vmatpush2.msra.mxu0 0.0
    %147 = vmatprep.subr.mxu0 0.0
    %148 = vmatpush2.msra.mxu0 0.0
    %149 = vmatprep.subr.mxu0 0.0
    %150 = vmatpush2.msra.mxu0 0.0
    %151 = vmatprep.subr.mxu0 0.0
    %152 = vmatpush2.msra.mxu0 0.0
    %153 = vmatprep.subr.mxu0 0.0
    %154 = vmatpush2.msra.mxu0 0.0
    %155 = vmatprep.subr.mxu0 0.0
    %156 = vmatpush2.msra.mxu0 0.0
    %157 = vmatprep.mubr.f32.mxu0 0.0
    %158 = vmatmul.mubr.f32.gmra.mxu0 %v48
    %v159 = vpop.f32.mrf.mxu0
    %v160 = vadd.f32 %v86, %v159
    %v161 = vpop.f32.mrf.mxu0
    %v162 = vadd.f32 %v90, %v161
    %163 = vdwg.mxu0
    %v164 = vmax.f32 %v160, 0.0
    %v165 = vmax.f32 %v162, 0.0
    %v166 = vld [vmem:[#allocation4] sm:$0xff]
    %v167 = vld [vmem:[#allocation4 + $0x8] sm:$0xff]
    %v168 = vld [vmem:[#allocation4 + $0x10] sm:$0xff]
    %v169 = vld [vmem:[#allocation4 + $0x18] sm:$0xff]
    %v170 = vld [vmem:[#allocation4 + $0x20] sm:$0xff]
    %v171 = vld [vmem:[#allocation4 + $0x28] sm:$0xff]
    %v172 = vld [vmem:[#allocation4 + $0x30] sm:$0xff]
    %v173 = vld [vmem:[#allocation4 + $0x38] sm:$0xff]
    %v174 = vld [vmem:[#allocation4 + $0x40] sm:$0xff]
    %v175 = vld [vmem:[#allocation4 + $0x48] sm:$0xff]
    %v176 = vld [vmem:[#allocation4 + $0x50] sm:$0xff]
    %v177 = vld [vmem:[#allocation4 + $0x58] sm:$0xff]
    %v178 = vld [vmem:[#allocation4 + $0x60] sm:$0xff]
    %v179 = vld [vmem:[#allocation4 + $0x68] sm:$0xff]
    %v180 = vld [vmem:[#allocation4 + $0x70] sm:$0xff]
    %v181 = vld [vmem:[#allocation4 + $0x78] sm:$0xff]
    %v182 = vld [vmem:[#allocation4 + $0x80] sm:$0xff]
    %v183 = vld [vmem:[#allocation4 + $0x88] sm:$0xff]
    %v184 = vld [vmem:[#allocation4 + $0x90] sm:$0xff]
    %v185 = vld [vmem:[#allocation4 + $0x98] sm:$0xff]
    %v186 = vld [vmem:[#allocation4 + $0xa0] sm:$0xff]
    %v187 = vld [vmem:[#allocation4 + $0xa8] sm:$0xff]
    %v188 = vld [vmem:[#allocation4 + $0xb0] sm:$0xff]
    %v189 = vld [vmem:[#allocation4 + $0xb8] sm:$0xff]
    %v190 = vld [vmem:[#allocation4 + $0xc0] sm:$0xff]
    %v191 = vld [vmem:[#allocation4 + $0xc8] sm:$0xff]
    %v192 = vld [vmem:[#allocation4 + $0xd0] sm:$0xff]
    %v193 = vld [vmem:[#allocation4 + $0xd8] sm:$0xff]
    %v194 = vld [vmem:[#allocation4 + $0xe0] sm:$0xff]
    %v195 = vld [vmem:[#allocation4 + $0xe8] sm:$0xff]
    %v196 = vld [vmem:[#allocation4 + $0xf0] sm:$0xff]
    %v197 = vld [vmem:[#allocation4 + $0xf8] sm:$0xff]
    %v198 = vld [vmem:[%s4] sm:$0x1]
    %v200 = vlaneseq
    %v201 = vshrl.u32 %v200, 7
    %v202 = vsub.s32 0, %v201
    %v203 = vrot.slane %v198, %v202
    %205 = vmatprep.subr.mxu0 0.0
    %206 = vmatpush1.msra.mxu0 %v181
    %207 = vmatprep.subr.mxu0 0.0
    %208 = vmatpush1.msra.mxu0 %v180
    %209 = vmatprep.subr.mxu0 0.0
    %210 = vmatpush1.msra.mxu0 %v179
    %211 = vmatprep.subr.mxu0 0.0
    %212 = vmatpush1.msra.mxu0 %v178
    %213 = vmatprep.subr.mxu0 0.0
    %214 = vmatpush1.msra.mxu0 %v177
    %215 = vmatprep.subr.mxu0 0.0
    %216 = vmatpush1.msra.mxu0 %v176
    %217 = vmatprep.subr.mxu0 0.0
    %218 = vmatpush1.msra.mxu0 %v175
    %219 = vmatprep.subr.mxu0 0.0
    %220 = vmatpush1.msra.mxu0 %v174
    %221 = vmatprep.subr.mxu0 0.0
    %222 = vmatpush1.msra.mxu0 %v173
    %223 = vmatprep.subr.mxu0 0.0
    %224 = vmatpush1.msra.mxu0 %v172
    %225 = vmatprep.subr.mxu0 0.0
    %226 = vmatpush1.msra.mxu0 %v171
    %227 = vmatprep.subr.mxu0 0.0
    %228 = vmatpush1.msra.mxu0 %v170
    %229 = vmatprep.subr.mxu0 0.0
    %230 = vmatpush1.msra.mxu0 %v169
    %231 = vmatprep.subr.mxu0 0.0
    %232 = vmatpush1.msra.mxu0 %v168
    %233 = vmatprep.subr.mxu0 0.0
    %234 = vmatpush1.msra.mxu0 %v167
    %235 = vmatprep.subr.mxu0 0.0
    %236 = vmatpush1.msra.mxu0 %v166
    %237 = vmatprep.subr.mxu0 0.0
    %238 = vmatpush2.msra.mxu0 %v197
    %239 = vmatprep.subr.mxu0 0.0
    %240 = vmatpush2.msra.mxu0 %v196
    %241 = vmatprep.subr.mxu0 0.0
    %242 = vmatpush2.msra.mxu0 %v195
    %243 = vmatprep.subr.mxu0 0.0
    %244 = vmatpush2.msra.mxu0 %v194
    %245 = vmatprep.subr.mxu0 0.0
    %246 = vmatpush2.msra.mxu0 %v193
    %247 = vmatprep.subr.mxu0 0.0
    %248 = vmatpush2.msra.mxu0 %v192
    %249 = vmatprep.subr.mxu0 0.0
    %250 = vmatpush2.msra.mxu0 %v191
    %251 = vmatprep.subr.mxu0 0.0
    %252 = vmatpush2.msra.mxu0 %v190
    %253 = vmatprep.subr.mxu0 0.0
    %254 = vmatpush2.msra.mxu0 %v189
    %255 = vmatprep.subr.mxu0 0.0
    %256 = vmatpush2.msra.mxu0 %v188
    %257 = vmatprep.subr.mxu0 0.0
    %258 = vmatpush2.msra.mxu0 %v187
    %259 = vmatprep.subr.mxu0 0.0
    %260 = vmatpush2.msra.mxu0 %v186
    %261 = vmatprep.subr.mxu0 0.0
    %262 = vmatpush2.msra.mxu0 %v185
    %263 = vmatprep.subr.mxu0 0.0
    %264 = vmatpush2.msra.mxu0 %v184
    %265 = vmatprep.subr.mxu0 0.0
    %266 = vmatpush2.msra.mxu0 %v183
    %267 = vmatprep.subr.mxu0 0.0
    %268 = vmatpush2.msra.mxu0 %v182
    %269 = vmatprep.mubr.f32.mxu0 %v165
    %270 = vmatmul.mubr.f32.gmra.mxu0 %v164
    %v271 = vpop.f32.mrf.mxu0
    %v272 = vadd.f32 %v203, %v271
    %v273 = vpop.f32.mrf.mxu0
    %274 = vdwg.mxu0
    %275 = vst [vmem:[%s5] sm:$0xff] %v272
    // Predicated region
    $region30: #{make_pos_forward.1} parent=1 // pred_check
      _
    $region31: #{make_pos_forward.1} parent=1 // pred_check_branch
      %277 = sbr.rel (0) target = $region33
    $region32: #{make_pos_forward.1} parent=1 // pred_region
      _
    $region33: #{make_pos_forward.1} parent=1 // pred_fallthru
      _
    // Predicated region
    $region34: #{make_pos_forward.1} parent=1 // pred_check
      _
    $region35: #{make_pos_forward.1} parent=1 // pred_check_branch
      %279 = sbr.rel (0) target = $region37
    $region36: #{make_pos_forward.1} parent=1 // pred_region
      _
    $region37: #{make_pos_forward.1} parent=1 // pred_fallthru
      _
    %280 = vsyncpa [#allocation3], 1
    %281 = vsyncpa [#allocation5], 1

</llo_original>
